<compile_context>
chip_gen: v7x
topology: tpu7x:2x2x1
jax: 0.10.0
libtpu: 0.0.40
codegen_flags: <defaults>
</compile_context>

<pallas_src>
import functools

import jax
import jax.numpy as jnp
from jax.experimental import pallas as pl
from jax.experimental.pallas import tpu as pltpu

LANE = 128
SUBLANE = 8
VMEM_BUDGET = 24 * 1024 * 1024        # conservative: fits v7x 32 MiB scoped VMEM
VMEM_LIMIT_CAP = 32 * 1024 * 1024


def _round_up(x, m):
    return (x + m - 1) // m * m


# --------------------------------------------------------------------------
# Kernel: all four matmuls accumulate in f32 on the MXU; bias/ReLU stay f32.
# --------------------------------------------------------------------------
def mlp_kernel(x_ref,
               w1_ref, b1_ref,
               w2_ref, b2_ref,
               w3_ref, b3_ref,
               w4_ref, b4_ref,
               o_ref):
    x = x_ref[...]

    h = jnp.dot(x, w1_ref[...], preferred_element_type=jnp.float32) + b1_ref[...]
    h = jnp.maximum(h, 0.0).astype(w2_ref.dtype)

    h = jnp.dot(h, w2_ref[...], preferred_element_type=jnp.float32) + b2_ref[...]
    h = jnp.maximum(h, 0.0).astype(w3_ref.dtype)

    h = jnp.dot(h, w3_ref[...], preferred_element_type=jnp.float32) + b3_ref[...]
    h = jnp.maximum(h, 0.0).astype(w4_ref.dtype)

    y = jnp.dot(h, w4_ref[...], preferred_element_type=jnp.float32) + b4_ref[...]
    o_ref[...] = y.astype(o_ref.dtype)


# --------------------------------------------------------------------------
# One-time parameter preparation (outside the hot jitted forward).
# --------------------------------------------------------------------------
def prepare_params(params, compute_dtype=jnp.bfloat16):
    """Pad params once.

    params: list of (W, b) with W shape (in, out).
    Only the *output* dims (hidden / output) are padded to 128 lanes; the
    input feature dim of the first layer (the K of the first matmul) is left
    unpadded so x needs no feature padding at call time.

    Returns (flat_params, true_dims) where flat_params is a tuple
    (w1, b1, ..., w4, b4) and true_dims = (F, H1, H2, H3, O).
    """
    true_dims = tuple([params[0][0].shape[0]] + [w.shape[1] for (w, _) in params])
    flat = []
    for li, (w, b) in enumerate(params):
        din, dout = w.shape
        pin = din if li == 0 else _round_up(din, LANE)   # first K stays unpadded
        pout = _round_up(dout, LANE)
        wp = jnp.zeros((pin, pout), compute_dtype).at[:din, :dout].set(
            w.astype(compute_dtype))
        bp = jnp.zeros((1, pout), jnp.float32).at[:, :dout].set(
            b.astype(jnp.float32))
        flat += [wp, bp]
    return tuple(flat), true_dims


def _choose_tile_b(B, tile_b, in_row_bytes, out_row_bytes, weight_bytes):
    tile = max(SUBLANE, min(_round_up(tile_b, SUBLANE), _round_up(B, SUBLANE)))
    # Prefer >= 2 grid steps for big batches so the "parallel" batch axis can
    # shard across both TensorCores on v7x (no-op cost on v5e/v6e).
    if _round_up(B, tile) // tile < 2 and B > 2 * SUBLANE:
        tile = max(SUBLANE, _round_up((B + 1) // 2, SUBLANE))
    # Cap so double-buffered x/out tiles + double-buffered weights fit budget.
    avail = max(0, VMEM_BUDGET - 2 * weight_bytes)
    max_rows = avail // (2 * (in_row_bytes + out_row_bytes))
    max_rows = max(SUBLANE, (max_rows // SUBLANE) * SUBLANE)
    return min(tile, max_rows)


# --------------------------------------------------------------------------
# Hot forward: only pads batch rows (if needed) and launches the kernel.
# --------------------------------------------------------------------------
@functools.partial(jax.jit, static_argnames=("true_dims", "tile_b"))
def mlp_forward(x, flat_params, true_dims, *, tile_b=2048):
    B, F = x.shape
    n_output = true_dims[-1]
    compute_dtype = flat_params[0].dtype          # matmul operand dtype
    o_pad = flat_params[-2].shape[1]              # padded output width (128-mult)

    x_c = x.astype(compute_dtype)

    in_row_bytes = F * jnp.dtype(compute_dtype).itemsize
    out_row_bytes = o_pad * jnp.dtype(compute_dtype).itemsize
    weight_bytes = sum(a.size * a.dtype.itemsize for a in flat_params)

    tile = _choose_tile_b(B, tile_b, in_row_bytes, out_row_bytes, weight_bytes)
    b_pad = _round_up(B, tile)
    if b_pad != B:
        x_c = jnp.pad(x_c, ((0, b_pad - B), (0, 0)))

    grid = (b_pad // tile,)

    # x is tiled over the batch; weights/biases use a constant index_map so
    # they stay VMEM-resident across grid steps.
    in_specs = [pl.BlockSpec((tile, F), lambda i: (i, 0))]
    for arr in flat_params:
        in_specs.append(pl.BlockSpec(arr.shape, lambda i: (0, 0)))
    out_specs = pl.BlockSpec((tile, o_pad), lambda i: (i, 0))

    # Cost estimate on TRUE dims (not padded).
    n_layers = len(true_dims) - 1
    flops = 2 * B * sum(true_dims[i] * true_dims[i + 1] for i in range(n_layers))
    param_bytes = sum(
        true_dims[i] * true_dims[i + 1] * jnp.dtype(compute_dtype).itemsize
        + true_dims[i + 1] * 4
        for i in range(n_layers))
    bytes_accessed = (B * F * jnp.dtype(compute_dtype).itemsize
                      + param_bytes
                      + B * n_output * jnp.dtype(compute_dtype).itemsize)

    vmem_needed = 2 * tile * (in_row_bytes + out_row_bytes) + 2 * weight_bytes
    vmem_limit = int(min(VMEM_LIMIT_CAP, max(16 * 1024 * 1024, 2 * vmem_needed)))

    out = pl.pallas_call(
        mlp_kernel,
        out_shape=jax.ShapeDtypeStruct((b_pad, o_pad), compute_dtype),
        grid=grid,
        in_specs=in_specs,
        out_specs=out_specs,
        compiler_params=pltpu.CompilerParams(
            dimension_semantics=("parallel",),
            vmem_limit_bytes=vmem_limit),
        cost_estimate=pl.CostEstimate(
            flops=flops, transcendentals=0, bytes_accessed=bytes_accessed),
    )(x_c, *flat_params)

    # Slice away batch/output padding and cast back to the input dtype.
    return out[:B, :n_output].astype(x.dtype)


# --------------------------------------------------------------------------
# Init + reference (pure JAX) for verification.
# --------------------------------------------------------------------------
def init_params(key, n_feature, n_hidden_1, n_hidden_2, n_hidden_3, n_output):
    """Mimics torch.nn.Linear's U(-1/sqrt(in), 1/sqrt(in)) init."""
    dims = [(n_feature, n_hidden_1),
            (n_hidden_1, n_hidden_2),
            (n_hidden_2, n_hidden_3),
            (n_hidden_3, n_output)]
    params = []
    for (fan_in, fan_out) in dims:
        key, kw, kb = jax.random.split(key, 3)
        bound = 1.0 / jnp.sqrt(jnp.float32(fan_in))
        w = jax.random.uniform(kw, (fan_in, fan_out), jnp.float32, -bound, bound)
        b = jax.random.uniform(kb, (fan_out,), jnp.float32, -bound, bound)
        params.append((w, b))
    return params


def reference_forward(x, params):
    h = x
    for i, (w, b) in enumerate(params):
        h = h @ w + b
        if i < len(params) - 1:
            h = jnp.maximum(h, 0.0)
    return h


if __name__ == "__main__":
    n_feature, n_hidden_1, n_hidden_2, n_hidden_3, n_output = 16, 32, 32, 16, 4

    key = jax.random.PRNGKey(0)
    key, kx1, kx2 = jax.random.split(key, 3)
    params = init_params(key, n_feature, n_hidden_1, n_hidden_2, n_hidden_3,
                         n_output)

    # Param prep happens ONCE, outside the hot forward.
    flat_f32, dims_f32 = prepare_params(params, compute_dtype=jnp.float32)
    flat_bf16, dims_bf16 = prepare_params(params)       # bf16 default

    # --- Small-shape f32 check (tight tolerance). ---
    B_small = 8
    x_small = jax.random.normal(kx1, (B_small, n_feature), jnp.float32)
    out_small = jax.block_until_ready(mlp_forward(x_small, flat_f32, dims_f32))
    ref_small = reference_forward(x_small, params)
    assert out_small.shape == (B_small, n_output)
    assert jnp.allclose(out_small, ref_small, atol=1e-5, rtol=1e-5), \
        "small-batch f32 mismatch vs reference"

    # --- Larger batch f32: exercises the batch grid (2 x 512-row tiles). ---
    B_big = 1024
    x_big = jax.random.normal(kx2, (B_big, n_feature), jnp.float32)
    out_big = jax.block_until_ready(mlp_forward(x_big, flat_f32, dims_f32))
    ref_big = reference_forward(x_big, params)
    assert out_big.shape == (B_big, n_output)
    assert jnp.allclose(out_big, ref_big, atol=1e-4, rtol=1e-4), \
        "large-batch f32 mismatch vs reference"

    # --- Default bf16 operand path (f32 accumulate), loose tolerance. ---
    out_bf16 = jax.block_until_ready(mlp_forward(x_big, flat_bf16, dims_bf16))
    assert out_bf16.shape == (B_big, n_output)
    assert jnp.allclose(out_bf16, ref_big, atol=0.15, rtol=0.15), \
        "bf16 mismatch vs reference"

    print("KERNEL_OK")
</pallas_src>

<mosaic_0001>
module attributes {stable_mosaic.version = 11 : i64} {
  func.func @mlp_kernel(%arg0: i32, %arg1: memref<8x16xf32, #tpu.memory_space<vmem>>, %arg2: memref<16x128xf32, #tpu.memory_space<vmem>>, %arg3: memref<1x128xf32, #tpu.memory_space<vmem>>, %arg4: memref<128x128xf32, #tpu.memory_space<vmem>>, %arg5: memref<1x128xf32, #tpu.memory_space<vmem>>, %arg6: memref<128x128xf32, #tpu.memory_space<vmem>>, %arg7: memref<1x128xf32, #tpu.memory_space<vmem>>, %arg8: memref<128x128xf32, #tpu.memory_space<vmem>>, %arg9: memref<1x128xf32, #tpu.memory_space<vmem>>, %arg10: memref<8x128xf32, #tpu.memory_space<vmem>>) attributes {dimension_semantics = [#tpu.dimension_semantics<parallel>], iteration_bounds = array<i64: 1>, scalar_prefetch = 0 : i64, scratch_operands = 0 : i64, tpu.core_type = #tpu.core_type<tc>, window_params = [{transform_indices = @transform_0, window_bounds = array<i64: 8, 16>}, {pipeline_mode = #tpu.pipeline_mode<synchronous>, transform_indices = @transform_1, window_bounds = array<i64: 16, 128>}, {pipeline_mode = #tpu.pipeline_mode<synchronous>, transform_indices = @transform_2, window_bounds = array<i64: 1, 128>}, {pipeline_mode = #tpu.pipeline_mode<synchronous>, transform_indices = @transform_3, window_bounds = array<i64: 128, 128>}, {pipeline_mode = #tpu.pipeline_mode<synchronous>, transform_indices = @transform_4, window_bounds = array<i64: 1, 128>}, {pipeline_mode = #tpu.pipeline_mode<synchronous>, transform_indices = @transform_5, window_bounds = array<i64: 128, 128>}, {pipeline_mode = #tpu.pipeline_mode<synchronous>, transform_indices = @transform_6, window_bounds = array<i64: 1, 128>}, {pipeline_mode = #tpu.pipeline_mode<synchronous>, transform_indices = @transform_7, window_bounds = array<i64: 128, 128>}, {pipeline_mode = #tpu.pipeline_mode<synchronous>, transform_indices = @transform_8, window_bounds = array<i64: 1, 128>}, {transform_indices = @transform_9, window_bounds = array<i64: 8, 128>}]} {
    %c0 = arith.constant 0 : index
    %c0_0 = arith.constant 0 : index
    %0 = vector.load %arg1[%c0, %c0_0] : memref<8x16xf32, #tpu.memory_space<vmem>>, vector<8x16xf32>
    %c0_1 = arith.constant 0 : index
    %c0_2 = arith.constant 0 : index
    %1 = vector.load %arg2[%c0_1, %c0_2] : memref<16x128xf32, #tpu.memory_space<vmem>>, vector<16x128xf32>
    %cst = arith.constant dense<0.000000e+00> : vector<8x128xf32>
    %2 = tpu.matmul %0, %1, %cst {dimension_numbers = #tpu.dot_dimension_numbers<[1], [0], [0], [1], [0, 0, 1, 1], [], []>} : vector<8x16xf32>, vector<16x128xf32>, vector<8x128xf32> -> vector<8x128xf32>
    %c0_3 = arith.constant 0 : index
    %c0_4 = arith.constant 0 : index
    %3 = vector.load %arg3[%c0_3, %c0_4] : memref<1x128xf32, #tpu.memory_space<vmem>>, vector<1x128xf32>
    %4 = vector.broadcast %3 : vector<1x128xf32> to vector<8x128xf32>
    %5 = arith.addf %2, %4 : vector<8x128xf32>
    %cst_5 = arith.constant 0.000000e+00 : f32
    %6 = vector.broadcast %cst_5 : f32 to vector<8x128xf32>
    %7 = arith.maximumf %5, %6 : vector<8x128xf32>
    %c0_6 = arith.constant 0 : index
    %c0_7 = arith.constant 0 : index
    %8 = vector.load %arg4[%c0_6, %c0_7] : memref<128x128xf32, #tpu.memory_space<vmem>>, vector<128x128xf32>
    %cst_8 = arith.constant dense<0.000000e+00> : vector<8x128xf32>
    %9 = tpu.matmul %7, %8, %cst_8 {dimension_numbers = #tpu.dot_dimension_numbers<[1], [0], [0], [1], [0, 0, 1, 1], [], []>} : vector<8x128xf32>, vector<128x128xf32>, vector<8x128xf32> -> vector<8x128xf32>
    %c0_9 = arith.constant 0 : index
    %c0_10 = arith.constant 0 : index
    %10 = vector.load %arg5[%c0_9, %c0_10] : memref<1x128xf32, #tpu.memory_space<vmem>>, vector<1x128xf32>
    %11 = vector.broadcast %10 : vector<1x128xf32> to vector<8x128xf32>
    %12 = arith.addf %9, %11 : vector<8x128xf32>
    %cst_11 = arith.constant 0.000000e+00 : f32
    %13 = vector.broadcast %cst_11 : f32 to vector<8x128xf32>
    %14 = arith.maximumf %12, %13 : vector<8x128xf32>
    %c0_12 = arith.constant 0 : index
    %c0_13 = arith.constant 0 : index
    %15 = vector.load %arg6[%c0_12, %c0_13] : memref<128x128xf32, #tpu.memory_space<vmem>>, vector<128x128xf32>
    %cst_14 = arith.constant dense<0.000000e+00> : vector<8x128xf32>
    %16 = tpu.matmul %14, %15, %cst_14 {dimension_numbers = #tpu.dot_dimension_numbers<[1], [0], [0], [1], [0, 0, 1, 1], [], []>} : vector<8x128xf32>, vector<128x128xf32>, vector<8x128xf32> -> vector<8x128xf32>
    %c0_15 = arith.constant 0 : index
    %c0_16 = arith.constant 0 : index
    %17 = vector.load %arg7[%c0_15, %c0_16] : memref<1x128xf32, #tpu.memory_space<vmem>>, vector<1x128xf32>
    %18 = vector.broadcast %17 : vector<1x128xf32> to vector<8x128xf32>
    %19 = arith.addf %16, %18 : vector<8x128xf32>
    %cst_17 = arith.constant 0.000000e+00 : f32
    %20 = vector.broadcast %cst_17 : f32 to vector<8x128xf32>
    %21 = arith.maximumf %19, %20 : vector<8x128xf32>
    %c0_18 = arith.constant 0 : index
    %c0_19 = arith.constant 0 : index
    %22 = vector.load %arg8[%c0_18, %c0_19] : memref<128x128xf32, #tpu.memory_space<vmem>>, vector<128x128xf32>
    %cst_20 = arith.constant dense<0.000000e+00> : vector<8x128xf32>
    %23 = tpu.matmul %21, %22, %cst_20 {dimension_numbers = #tpu.dot_dimension_numbers<[1], [0], [0], [1], [0, 0, 1, 1], [], []>} : vector<8x128xf32>, vector<128x128xf32>, vector<8x128xf32> -> vector<8x128xf32>
    %c0_21 = arith.constant 0 : index
    %c0_22 = arith.constant 0 : index
    %24 = vector.load %arg9[%c0_21, %c0_22] : memref<1x128xf32, #tpu.memory_space<vmem>>, vector<1x128xf32>
    %25 = vector.broadcast %24 : vector<1x128xf32> to vector<8x128xf32>
    %26 = arith.addf %23, %25 : vector<8x128xf32>
    %c0_23 = arith.constant 0 : index
    %c0_24 = arith.constant 0 : index
    %27 = vector.load %arg10[%c0_23, %c0_24] : memref<8x128xf32, #tpu.memory_space<vmem>>, vector<8x128xf32>
    tpu.vector_store %arg10[%c0_23, %c0_24], %26 {strides = array<i32>} : memref<8x128xf32, #tpu.memory_space<vmem>>, vector<8x128xf32>,
    return
  }
  func.func @transform_0(%arg0: i32) -> (i32, i32) {
    %c0_i32 = arith.constant 0 : i32
    %c0_i32_0 = arith.constant 0 : i32
    return %arg0, %c0_i32 : i32, i32
  }
  func.func @transform_1(%arg0: i32) -> (i32, i32) {
    %c0_i32 = arith.constant 0 : i32
    %c0_i32_0 = arith.constant 0 : i32
    %c0_i32_1 = arith.constant 0 : i32
    return %c0_i32, %c0_i32_0 : i32, i32
  }
  func.func @transform_2(%arg0: i32) -> (i32, i32) {
    %c0_i32 = arith.constant 0 : i32
    %c0_i32_0 = arith.constant 0 : i32
    %c0_i32_1 = arith.constant 0 : i32
    return %c0_i32, %c0_i32_0 : i32, i32
  }
  func.func @transform_3(%arg0: i32) -> (i32, i32) {
    %c0_i32 = arith.constant 0 : i32
    %c0_i32_0 = arith.constant 0 : i32
    %c0_i32_1 = arith.constant 0 : i32
    return %c0_i32, %c0_i32_0 : i32, i32
  }
  func.func @transform_4(%arg0: i32) -> (i32, i32) {
    %c0_i32 = arith.constant 0 : i32
    %c0_i32_0 = arith.constant 0 : i32
    %c0_i32_1 = arith.constant 0 : i32
    return %c0_i32, %c0_i32_0 : i32, i32
  }
  func.func @transform_5(%arg0: i32) -> (i32, i32) {
    %c0_i32 = arith.constant 0 : i32
    %c0_i32_0 = arith.constant 0 : i32
    %c0_i32_1 = arith.constant 0 : i32
    return %c0_i32, %c0_i32_0 : i32, i32
  }
  func.func @transform_6(%arg0: i32) -> (i32, i32) {
    %c0_i32 = arith.constant 0 : i32
    %c0_i32_0 = arith.constant 0 : i32
    %c0_i32_1 = arith.constant 0 : i32
    return %c0_i32, %c0_i32_0 : i32, i32
  }
  func.func @transform_7(%arg0: i32) -> (i32, i32) {
    %c0_i32 = arith.constant 0 : i32
    %c0_i32_0 = arith.constant 0 : i32
    %c0_i32_1 = arith.constant 0 : i32
    return %c0_i32, %c0_i32_0 : i32, i32
  }
  func.func @transform_8(%arg0: i32) -> (i32, i32) {
    %c0_i32 = arith.constant 0 : i32
    %c0_i32_0 = arith.constant 0 : i32
    %c0_i32_1 = arith.constant 0 : i32
    return %c0_i32, %c0_i32_0 : i32, i32
  }
  func.func @transform_9(%arg0: i32) -> (i32, i32) {
    %c0_i32 = arith.constant 0 : i32
    %c0_i32_0 = arith.constant 0 : i32
    return %arg0, %c0_i32 : i32, i32
  }
}

</mosaic_0001>

<llo_original>
// kernel: mlp_forward.1
$region0: #{mlp_forward.1}
  #allocation0 [shape = 'u32[]', space=smem, size = 0x4, offset = 0x4, fixed_abs, tag = 'smem constant byte address 0x4 - core index']
  #allocation1 [shape = 'u32[144,128]{1,0:T(1,128)}', space=vmem, size = 0x12000, scoped, tag = 'internal scratch']
  %s0 = inlined_call_operand.hbm [shape: f32[8,16], index: 0, kind: input, shape index: {}]
  %s1 = inlined_call_operand.hbm [shape: f32[16,128], index: 1, kind: input, shape index: {}]
  %s2 = inlined_call_operand.vmem [shape: f32[1,128], index: 2, kind: input, shape index: {}]
  %s3 = inlined_call_operand.hbm [shape: f32[128,128], index: 3, kind: input, shape index: {}]
  %s4 = inlined_call_operand.vmem [shape: f32[1,128], index: 4, kind: input, shape index: {}]
  %s5 = inlined_call_operand.hbm [shape: f32[128,128], index: 5, kind: input, shape index: {}]
  %s6 = inlined_call_operand.vmem [shape: f32[1,128], index: 6, kind: input, shape index: {}]
  %s7 = inlined_call_operand.hbm [shape: f32[128,128], index: 7, kind: input, shape index: {}]
  %s8 = inlined_call_operand.vmem [shape: f32[1,128], index: 8, kind: input, shape index: {}]
  %s9 = inlined_call_operand.vmem [shape: f32[8,128], index: 9, kind: output, shape index: {}]
  %s10 = sld [smem:[#allocation0]]
  $region66: #{mlp_forward.1} parent=0
    _
  %s12 = ssub.s32 1, %s10
  %s13 = scalar_select 0, %s12, %s10
  $region1: #{mlp_forward.1} parent=0
    #allocation2 [shape = 'u8[4096]{0}', space=vmem, size = 0x1000, scoped, tag = 'input window, operand 0, single buffered']
    #allocation3 [shape = 's32[1]{0}', space=sflag, size = 0x4, scoped, tag = 'scoped memory for mlp_forward.1']
    #allocation4 [shape = 'u8[8192]{0}', space=vmem, size = 0x2000, scoped, tag = 'input window, operand 1, single buffered']
    #allocation5 [shape = 's32[1]{0}', space=sflag, size = 0x4, scoped, tag = 'scoped memory for mlp_forward.1']
    #allocation6 [shape = 'u8[65536]{0}', space=vmem, size = 0x10000, scoped, tag = 'input window, operand 3, single buffered']
    #allocation7 [shape = 'u8[65536]{0}', space=vmem, size = 0x10000, scoped, tag = 'input window, operand 5, single buffered']
    #allocation8 [shape = 's32[1]{0}', space=sflag, size = 0x4, scoped, tag = 'scoped memory for mlp_forward.1']
    #allocation9 [shape = 'u8[65536]{0}', space=vmem, size = 0x10000, scoped, tag = 'input window, operand 7, single buffered']
    %14 = vsyncpa [#allocation3], 0
    %15 = vsyncpa [#allocation5], 0
    %16 = vsyncpa [#allocation8], 0
    // Predicated region
    $region2: #{mlp_forward.1} parent=1 // pred_check
      _
    $region3: #{mlp_forward.1} parent=1 // pred_check_branch
      %18 = sbr.rel (0) target = $region5
    $region4: #{mlp_forward.1} parent=1 // pred_region
      %s20 = ssub.s32 128, 128
      %21 = vsyncadd [#allocation3], %s20
      %s23 = sshll.u32 [#allocation2], 4
      %s24 = int_to_ptr.vmem [resolvable:$true] %s23
      %26 = dma.hbm_to_vmem [thread:$0]  %s0, 128, %s24, [#allocation3]
    $region5: #{mlp_forward.1} parent=1 // pred_fallthru
      _
    // Predicated region
    $region6: #{mlp_forward.1} parent=1 // pred_check
      _
    $region7: #{mlp_forward.1} parent=1 // pred_check_branch
      %28 = sbr.rel (0) target = $region9
    $region8: #{mlp_forward.1} parent=1 // pred_region
      %s30 = ssub.s32 256, 256
      %31 = vsyncadd [#allocation5], %s30
      %s32 = sshll.u32 [#allocation4], 4
      %s33 = int_to_ptr.vmem [resolvable:$true] %s32
      %38 = dma.hbm_to_vmem [thread:$0]  %s1, 256, %s33, [#allocation5], 128, 128, 8
    $region9: #{mlp_forward.1} parent=1 // pred_fallthru
      _
    // Predicated region
    $region10: #{mlp_forward.1} parent=1 // pred_check
      _
    $region11: #{mlp_forward.1} parent=1 // pred_check_branch
      %40 = sbr.rel (0) target = $region13
    $region12: #{mlp_forward.1} parent=1 // pred_region
      _
    $region13: #{mlp_forward.1} parent=1 // pred_fallthru
      _
    // Predicated region
    $region14: #{mlp_forward.1} parent=1 // pred_check
      _
    $region15: #{mlp_forward.1} parent=1 // pred_check_branch
      %42 = sbr.rel (0) target = $region17
    $region16: #{mlp_forward.1} parent=1 // pred_region
      %s44 = ssub.s32 2048, 2048
      %45 = vsyncadd [#allocation5], %s44
      %s46 = sshll.u32 [#allocation6], 4
      %s47 = int_to_ptr.vmem [resolvable:$true] %s46
      %52 = dma.hbm_to_vmem [thread:$0]  %s3, 2048, %s47, [#allocation5], 128, 128, 8
    $region17: #{mlp_forward.1} parent=1 // pred_fallthru
      _
    // Predicated region
    $region18: #{mlp_forward.1} parent=1 // pred_check
      _
    $region19: #{mlp_forward.1} parent=1 // pred_check_branch
      %54 = sbr.rel (0) target = $region21
    $region20: #{mlp_forward.1} parent=1 // pred_region
      _
    $region21: #{mlp_forward.1} parent=1 // pred_fallthru
      _
    // Predicated region
    $region22: #{mlp_forward.1} parent=1 // pred_check
      _
    $region23: #{mlp_forward.1} parent=1 // pred_check_branch
      %56 = sbr.rel (0) target = $region25
    $region24: #{mlp_forward.1} parent=1 // pred_region
      %s58 = ssub.s32 2048, 2048
      %59 = vsyncadd [#allocation8], %s58
      %s60 = sshll.u32 [#allocation7], 4
      %s61 = int_to_ptr.vmem [resolvable:$true] %s60
      %66 = dma.hbm_to_vmem [thread:$0]  %s5, 2048, %s61, [#allocation8], 128, 128, 8
    $region25: #{mlp_forward.1} parent=1 // pred_fallthru
      _
    // Predicated region
    $region26: #{mlp_forward.1} parent=1 // pred_check
      _
    $region27: #{mlp_forward.1} parent=1 // pred_check_branch
      %68 = sbr.rel (0) target = $region29
    $region28: #{mlp_forward.1} parent=1 // pred_region
      _
    $region29: #{mlp_forward.1} parent=1 // pred_fallthru
      _
    // Predicated region
    $region30: #{mlp_forward.1} parent=1 // pred_check
      _
    $region31: #{mlp_forward.1} parent=1 // pred_check_branch
      %70 = sbr.rel (0) target = $region33
    $region32: #{mlp_forward.1} parent=1 // pred_region
      %s72 = ssub.s32 2048, 2048
      %73 = vsyncadd [#allocation8], %s72
      %s74 = sshll.u32 [#allocation9], 4
      %s75 = int_to_ptr.vmem [resolvable:$true] %s74
      %80 = dma.hbm_to_vmem [thread:$0]  %s7, 2048, %s75, [#allocation8], 128, 128, 8
    $region33: #{mlp_forward.1} parent=1 // pred_fallthru
      _
    // Predicated region
    $region34: #{mlp_forward.1} parent=1 // pred_check
      _
    $region35: #{mlp_forward.1} parent=1 // pred_check_branch
      %82 = sbr.rel (0) target = $region37
    $region36: #{mlp_forward.1} parent=1 // pred_region
      _
    $region37: #{mlp_forward.1} parent=1 // pred_fallthru
      _
    // Predicated region
    $region38: #{mlp_forward.1} parent=1 // pred_check
      _
    $region39: #{mlp_forward.1} parent=1 // pred_check_branch
      %84 = sbr.rel (0) target = $region41
    $region40: #{mlp_forward.1} parent=1 // pred_region
      %85 = dma.done [#allocation3], 128
    $region41: #{mlp_forward.1} parent=1 // pred_fallthru
      _
    // Predicated region
    $region42: #{mlp_forward.1} parent=1 // pred_check
      _
    $region43: #{mlp_forward.1} parent=1 // pred_check_branch
      %87 = sbr.rel (0) target = $region45
    $region44: #{mlp_forward.1} parent=1 // pred_region
      %88 = dma.done [#allocation5], 256
    $region45: #{mlp_forward.1} parent=1 // pred_fallthru
      _
    // Predicated region
    $region46: #{mlp_forward.1} parent=1 // pred_check
      _
    $region47: #{mlp_forward.1} parent=1 // pred_check_branch
      %90 = sbr.rel (0) target = $region49
    $region48: #{mlp_forward.1} parent=1 // pred_region
      %91 = dma.done [#allocation5], 2048
    $region49: #{mlp_forward.1} parent=1 // pred_fallthru
      _
    // Predicated region
    $region50: #{mlp_forward.1} parent=1 // pred_check
      _
    $region51: #{mlp_forward.1} parent=1 // pred_check_branch
      %93 = sbr.rel (0) target = $region53
    $region52: #{mlp_forward.1} parent=1 // pred_region
      %94 = dma.done [#allocation8], 2048
    $region53: #{mlp_forward.1} parent=1 // pred_fallthru
      _
    // Predicated region
    $region54: #{mlp_forward.1} parent=1 // pred_check
      _
    $region55: #{mlp_forward.1} parent=1 // pred_check_branch
      %96 = sbr.rel (0) target = $region57
    $region56: #{mlp_forward.1} parent=1 // pred_region
      %97 = dma.done [#allocation8], 2048
    $region57: #{mlp_forward.1} parent=1 // pred_fallthru
      _
    %v98 = vld [vmem:[#allocation2] sm:$0xff]
    %v99 = vld [vmem:[#allocation4] sm:$0xff]
    %v100 = vld [vmem:[#allocation4 + $0x8] sm:$0xff]
    %v101 = vld [vmem:[%s2] sm:$0x1]
    %v103 = vlaneseq
    %v104 = vshrl.u32 %v103, 7
    %v105 = vsub.s32 0, %v104
    %v106 = vrot.slane %v101, %v105
    %vm108 = vcmask 130048
    %v110 = vsel %vm108, %v98, 0
    %112 = vmatprep.subr.mxu0 0.0
    %113 = vmatpush1.msra.mxu0 %v99
    %114 = vmatprep.subr.mxu0 0.0
    %115 = vmatpush1.msra.mxu0 %v100
    %116 = vmatprep.subr.mxu0 0.0
    %117 = vmatpush1.msra.mxu0 0.0
    %118 = vmatprep.subr.mxu0 0.0
    %119 = vmatpush1.msra.mxu0 0.0
    %120 = vmatprep.subr.mxu0 0.0
    %121 = vmatpush1.msra.mxu0 0.0
    %122 = vmatprep.subr.mxu0 0.0
    %123 = vmatpush1.msra.mxu0 0.0
    %124 = vmatprep.subr.mxu0 0.0
    %125 = vmatpush1.msra.mxu0 0.0
    %126 = vmatprep.subr.mxu0 0.0
    %127 = vmatpush1.msra.mxu0 0.0
    %128 = vmatprep.subr.mxu0 0.0
    %129 = vmatpush1.msra.mxu0 0.0
    %130 = vmatprep.subr.mxu0 0.0
    %131 = vmatpush1.msra.mxu0 0.0
    %132 = vmatprep.subr.mxu0 0.0
    %133 = vmatpush1.msra.mxu0 0.0
    %134 = vmatprep.subr.mxu0 0.0
    %135 = vmatpush1.msra.mxu0 0.0
    %136 = vmatprep.subr.mxu0 0.0
    %137 = vmatpush1.msra.mxu0 0.0
    %138 = vmatprep.subr.mxu0 0.0
    %139 = vmatpush1.msra.mxu0 0.0
    %140 = vmatprep.subr.mxu0 0.0
    %141 = vmatpush1.msra.mxu0 0.0
    %142 = vmatprep.subr.mxu0 0.0
    %143 = vmatpush1.msra.mxu0 0.0
    %144 = vmatprep.subr.mxu0 0.0
    %145 = vmatpush1.msra.mxu0 0.0
    %146 = vmatprep.subr.mxu0 0.0
    %147 = vmatpush1.msra.mxu0 0.0
    %148 = vmatprep.subr.mxu0 0.0
    %149 = vmatpush1.msra.mxu0 0.0
    %150 = vmatprep.subr.mxu0 0.0
    %151 = vmatpush1.msra.mxu0 0.0
    %152 = vmatprep.subr.mxu0 0.0
    %153 = vmatpush1.msra.mxu0 0.0
    %154 = vmatprep.subr.mxu0 0.0
    %155 = vmatpush1.msra.mxu0 0.0
    %156 = vmatprep.subr.mxu0 0.0
    %157 = vmatpush1.msra.mxu0 0.0
    %158 = vmatprep.subr.mxu0 0.0
    %159 = vmatpush1.msra.mxu0 0.0
    %160 = vmatprep.subr.mxu0 0.0
    %161 = vmatpush1.msra.mxu0 0.0
    %162 = vmatprep.subr.mxu0 0.0
    %163 = vmatpush1.msra.mxu0 0.0
    %164 = vmatprep.subr.mxu0 0.0
    %165 = vmatpush1.msra.mxu0 0.0
    %166 = vmatprep.subr.mxu0 0.0
    %167 = vmatpush1.msra.mxu0 0.0
    %168 = vmatprep.subr.mxu0 0.0
    %169 = vmatpush1.msra.mxu0 0.0
    %170 = vmatprep.subr.mxu0 0.0
    %171 = vmatpush1.msra.mxu0 0.0
    %172 = vmatprep.subr.mxu0 0.0
    %173 = vmatpush1.msra.mxu0 0.0
    %174 = vmatprep.subr.mxu0 0.0
    %175 = vmatpush1.msra.mxu0 0.0
    %176 = vmatprep.mubr.f32.mxu0 0.0
    %177 = vmatmul.mubr.f32.gmra.mrb[0].mxu0 %v110
    %v178 = vpop.f32.mrb[0].mxu0
    %v179 = vadd.f32 %v106, %v178
    %v180 = vpop.f32.mrb[0].mxu0
    %181 = vdwg.mxu0
    %v182 = vmax.f32 %v179, 0.0
    %v183 = vld [vmem:[#allocation6] sm:$0xff]
    %v184 = vld [vmem:[#allocation6 + $0x8] sm:$0xff]
    %v185 = vld [vmem:[#allocation6 + $0x10] sm:$0xff]
    %v186 = vld [vmem:[#allocation6 + $0x18] sm:$0xff]
    %v187 = vld [vmem:[#allocation6 + $0x20] sm:$0xff]
    %v188 = vld [vmem:[#allocation6 + $0x28] sm:$0xff]
    %v189 = vld [vmem:[#allocation6 + $0x30] sm:$0xff]
    %v190 = vld [vmem:[#allocation6 + $0x38] sm:$0xff]
    %v191 = vld [vmem:[#allocation6 + $0x40] sm:$0xff]
    %v192 = vld [vmem:[#allocation6 + $0x48] sm:$0xff]
    %v193 = vld [vmem:[#allocation6 + $0x50] sm:$0xff]
    %v194 = vld [vmem:[#allocation6 + $0x58] sm:$0xff]
    %v195 = vld [vmem:[#allocation6 + $0x60] sm:$0xff]
    %v196 = vld [vmem:[#allocation6 + $0x68] sm:$0xff]
    %v197 = vld [vmem:[#allocation6 + $0x70] sm:$0xff]
    %v198 = vld [vmem:[#allocation6 + $0x78] sm:$0xff]
    %v199 = vld [vmem:[%s4] sm:$0x1]
    %v201 = vlaneseq
    %v202 = vshrl.u32 %v201, 7
    %v203 = vsub.s32 0, %v202
    %v204 = vrot.slane %v199, %v203
    %206 = vmatprep.subr.mxu0 0.0
    %207 = vmatpush1.msra.mxu0 %v183
    %208 = vmatprep.subr.mxu0 0.0
    %209 = vmatpush1.msra.mxu0 %v184
    %210 = vmatprep.subr.mxu0 0.0
    %211 = vmatpush1.msra.mxu0 %v185
    %212 = vmatprep.subr.mxu0 0.0
    %213 = vmatpush1.msra.mxu0 %v186
    %214 = vmatprep.subr.mxu0 0.0
    %215 = vmatpush1.msra.mxu0 %v187
    %216 = vmatprep.subr.mxu0 0.0
    %217 = vmatpush1.msra.mxu0 %v188
    %218 = vmatprep.subr.mxu0 0.0
    %219 = vmatpush1.msra.mxu0 %v189
    %220 = vmatprep.subr.mxu0 0.0
    %221 = vmatpush1.msra.mxu0 %v190
    %222 = vmatprep.subr.mxu0 0.0
    %223 = vmatpush1.msra.mxu0 %v191
    %224 = vmatprep.subr.mxu0 0.0
    %225 = vmatpush1.msra.mxu0 %v192
    %226 = vmatprep.subr.mxu0 0.0
    %227 = vmatpush1.msra.mxu0 %v193
    %228 = vmatprep.subr.mxu0 0.0
    %229 = vmatpush1.msra.mxu0 %v194
    %230 = vmatprep.subr.mxu0 0.0
    %231 = vmatpush1.msra.mxu0 %v195
    %232 = vmatprep.subr.mxu0 0.0
    %233 = vmatpush1.msra.mxu0 %v196
    %234 = vmatprep.subr.mxu0 0.0
    %235 = vmatpush1.msra.mxu0 %v197
    %236 = vmatprep.subr.mxu0 0.0
    %237 = vmatpush1.msra.mxu0 %v198
    %238 = vmatprep.subr.mxu0 0.0
    %239 = vmatpush1.msra.mxu0 0.0
    %240 = vmatprep.subr.mxu0 0.0
    %241 = vmatpush1.msra.mxu0 0.0
    %242 = vmatprep.subr.mxu0 0.0
    %243 = vmatpush1.msra.mxu0 0.0
    %244 = vmatprep.subr.mxu0 0.0
    %245 = vmatpush1.msra.mxu0 0.0
    %246 = vmatprep.subr.mxu0 0.0
    %247 = vmatpush1.msra.mxu0 0.0
    %248 = vmatprep.subr.mxu0 0.0
    %249 = vmatpush1.msra.mxu0 0.0
    %250 = vmatprep.subr.mxu0 0.0
    %251 = vmatpush1.msra.mxu0 0.0
    %252 = vmatprep.subr.mxu0 0.0
    %253 = vmatpush1.msra.mxu0 0.0
    %254 = vmatprep.subr.mxu0 0.0
    %255 = vmatpush1.msra.mxu0 0.0
    %256 = vmatprep.subr.mxu0 0.0
    %257 = vmatpush1.msra.mxu0 0.0
    %258 = vmatprep.subr.mxu0 0.0
    %259 = vmatpush1.msra.mxu0 0.0
    %260 = vmatprep.subr.mxu0 0.0
    %261 = vmatpush1.msra.mxu0 0.0
    %262 = vmatprep.subr.mxu0 0.0
    %263 = vmatpush1.msra.mxu0 0.0
    %264 = vmatprep.subr.mxu0 0.0
    %265 = vmatpush1.msra.mxu0 0.0
    %266 = vmatprep.subr.mxu0 0.0
    %267 = vmatpush1.msra.mxu0 0.0
    %268 = vmatprep.subr.mxu0 0.0
    %269 = vmatpush1.msra.mxu0 0.0
    %270 = vmatprep.mubr.f32.mxu0 0.0
    %271 = vmatmul.mubr.f32.gmra.mrb[0].mxu0 %v182
    %v272 = vpop.f32.mrb[0].mxu0
    %v273 = vadd.f32 %v204, %v272
    %v274 = vpop.f32.mrb[0].mxu0
    %275 = vdwg.mxu0
    %v276 = vmax.f32 %v273, 0.0
    %v277 = vld [vmem:[#allocation7] sm:$0xff]
    %v278 = vld [vmem:[#allocation7 + $0x8] sm:$0xff]
    %v279 = vld [vmem:[#allocation7 + $0x10] sm:$0xff]
    %v280 = vld [vmem:[#allocation7 + $0x18] sm:$0xff]
    %v281 = vld [vmem:[#allocation7 + $0x20] sm:$0xff]
    %v282 = vld [vmem:[#allocation7 + $0x28] sm:$0xff]
    %v283 = vld [vmem:[#allocation7 + $0x30] sm:$0xff]
    %v284 = vld [vmem:[#allocation7 + $0x38] sm:$0xff]
    %v285 = vld [vmem:[#allocation7 + $0x40] sm:$0xff]
    %v286 = vld [vmem:[#allocation7 + $0x48] sm:$0xff]
    %v287 = vld [vmem:[#allocation7 + $0x50] sm:$0xff]
    %v288 = vld [vmem:[#allocation7 + $0x58] sm:$0xff]
    %v289 = vld [vmem:[#allocation7 + $0x60] sm:$0xff]
    %v290 = vld [vmem:[#allocation7 + $0x68] sm:$0xff]
    %v291 = vld [vmem:[#allocation7 + $0x70] sm:$0xff]
    %v292 = vld [vmem:[#allocation7 + $0x78] sm:$0xff]
    %v293 = vld [vmem:[%s6] sm:$0x1]
    %v295 = vlaneseq
    %v296 = vshrl.u32 %v295, 7
    %v297 = vsub.s32 0, %v296
    %v298 = vrot.slane %v293, %v297
    %300 = vmatprep.subr.mxu0 0.0
    %301 = vmatpush1.msra.mxu0 %v277
    %302 = vmatprep.subr.mxu0 0.0
    %303 = vmatpush1.msra.mxu0 %v278
    %304 = vmatprep.subr.mxu0 0.0
    %305 = vmatpush1.msra.mxu0 %v279
    %306 = vmatprep.subr.mxu0 0.0
    %307 = vmatpush1.msra.mxu0 %v280
    %308 = vmatprep.subr.mxu0 0.0
    %309 = vmatpush1.msra.mxu0 %v281
    %310 = vmatprep.subr.mxu0 0.0
    %311 = vmatpush1.msra.mxu0 %v282
    %312 = vmatprep.subr.mxu0 0.0
    %313 = vmatpush1.msra.mxu0 %v283
    %314 = vmatprep.subr.mxu0 0.0
    %315 = vmatpush1.msra.mxu0 %v284
    %316 = vmatprep.subr.mxu0 0.0
    %317 = vmatpush1.msra.mxu0 %v285
    %318 = vmatprep.subr.mxu0 0.0
    %319 = vmatpush1.msra.mxu0 %v286
    %320 = vmatprep.subr.mxu0 0.0
    %321 = vmatpush1.msra.mxu0 %v287
    %322 = vmatprep.subr.mxu0 0.0
    %323 = vmatpush1.msra.mxu0 %v288
    %324 = vmatprep.subr.mxu0 0.0
    %325 = vmatpush1.msra.mxu0 %v289
    %326 = vmatprep.subr.mxu0 0.0
    %327 = vmatpush1.msra.mxu0 %v290
    %328 = vmatprep.subr.mxu0 0.0
    %329 = vmatpush1.msra.mxu0 %v291
    %330 = vmatprep.subr.mxu0 0.0
    %331 = vmatpush1.msra.mxu0 %v292
    %332 = vmatprep.subr.mxu0 0.0
    %333 = vmatpush1.msra.mxu0 0.0
    %334 = vmatprep.subr.mxu0 0.0
    %335 = vmatpush1.msra.mxu0 0.0
    %336 = vmatprep.subr.mxu0 0.0
    %337 = vmatpush1.msra.mxu0 0.0
    %338 = vmatprep.subr.mxu0 0.0
    %339 = vmatpush1.msra.mxu0 0.0
    %340 = vmatprep.subr.mxu0 0.0
    %341 = vmatpush1.msra.mxu0 0.0
    %342 = vmatprep.subr.mxu0 0.0
    %343 = vmatpush1.msra.mxu0 0.0
    %344 = vmatprep.subr.mxu0 0.0
    %345 = vmatpush1.msra.mxu0 0.0
    %346 = vmatprep.subr.mxu0 0.0
    %347 = vmatpush1.msra.mxu0 0.0
    %348 = vmatprep.subr.mxu0 0.0
    %349 = vmatpush1.msra.mxu0 0.0
    %350 = vmatprep.subr.mxu0 0.0
    %351 = vmatpush1.msra.mxu0 0.0
    %352 = vmatprep.subr.mxu0 0.0
    %353 = vmatpush1.msra.mxu0 0.0
    %354 = vmatprep.subr.mxu0 0.0
    %355 = vmatpush1.msra.mxu0 0.0
    %356 = vmatprep.subr.mxu0 0.0
    %357 = vmatpush1.msra.mxu0 0.0
    %358 = vmatprep.subr.mxu0 0.0
    %359 = vmatpush1.msra.mxu0 0.0
    %360 = vmatprep.subr.mxu0 0.0
    %361 = vmatpush1.msra.mxu0 0.0
    %362 = vmatprep.subr.mxu0 0.0
    %363 = vmatpush1.msra.mxu0 0.0
    %364 = vmatprep.mubr.f32.mxu0 0.0
    %365 = vmatmul.mubr.f32.gmra.mrb[0].mxu0 %v276
    %v366 = vpop.f32.mrb[0].mxu0
    %v367 = vadd.f32 %v298, %v366
    %v368 = vpop.f32.mrb[0].mxu0
    %369 = vdwg.mxu0
    %v370 = vmax.f32 %v367, 0.0
    %v371 = vld [vmem:[#allocation9] sm:$0xff]
    %v372 = vld [vmem:[#allocation9 + $0x8] sm:$0xff]
    %v373 = vld [vmem:[#allocation9 + $0x10] sm:$0xff]
    %v374 = vld [vmem:[#allocation9 + $0x18] sm:$0xff]
    %v375 = vld [vmem:[#allocation9 + $0x20] sm:$0xff]
    %v376 = vld [vmem:[#allocation9 + $0x28] sm:$0xff]
    %v377 = vld [vmem:[#allocation9 + $0x30] sm:$0xff]
    %v378 = vld [vmem:[#allocation9 + $0x38] sm:$0xff]
    %v379 = vld [vmem:[#allocation9 + $0x40] sm:$0xff]
    %v380 = vld [vmem:[#allocation9 + $0x48] sm:$0xff]
    %v381 = vld [vmem:[#allocation9 + $0x50] sm:$0xff]
    %v382 = vld [vmem:[#allocation9 + $0x58] sm:$0xff]
    %v383 = vld [vmem:[#allocation9 + $0x60] sm:$0xff]
    %v384 = vld [vmem:[#allocation9 + $0x68] sm:$0xff]
    %v385 = vld [vmem:[#allocation9 + $0x70] sm:$0xff]
    %v386 = vld [vmem:[#allocation9 + $0x78] sm:$0xff]
    %v387 = vld [vmem:[%s8] sm:$0x1]
    %v389 = vlaneseq
    %v390 = vshrl.u32 %v389, 7
    %v391 = vsub.s32 0, %v390
    %v392 = vrot.slane %v387, %v391
    %394 = vmatprep.subr.mxu0 0.0
    %395 = vmatpush1.msra.mxu0 %v371
    %396 = vmatprep.subr.mxu0 0.0
    %397 = vmatpush1.msra.mxu0 %v372
    %398 = vmatprep.subr.mxu0 0.0
    %399 = vmatpush1.msra.mxu0 %v373
    %400 = vmatprep.subr.mxu0 0.0
    %401 = vmatpush1.msra.mxu0 %v374
    %402 = vmatprep.subr.mxu0 0.0
    %403 = vmatpush1.msra.mxu0 %v375
    %404 = vmatprep.subr.mxu0 0.0
    %405 = vmatpush1.msra.mxu0 %v376
    %406 = vmatprep.subr.mxu0 0.0
    %407 = vmatpush1.msra.mxu0 %v377
    %408 = vmatprep.subr.mxu0 0.0
    %409 = vmatpush1.msra.mxu0 %v378
    %410 = vmatprep.subr.mxu0 0.0
    %411 = vmatpush1.msra.mxu0 %v379
    %412 = vmatprep.subr.mxu0 0.0
    %413 = vmatpush1.msra.mxu0 %v380
    %414 = vmatprep.subr.mxu0 0.0
    %415 = vmatpush1.msra.mxu0 %v381
    %416 = vmatprep.subr.mxu0 0.0
    %417 = vmatpush1.msra.mxu0 %v382
    %418 = vmatprep.subr.mxu0 0.0
    %419 = vmatpush1.msra.mxu0 %v383
    %420 = vmatprep.subr.mxu0 0.0
    %421 = vmatpush1.msra.mxu0 %v384
    %422 = vmatprep.subr.mxu0 0.0
    %423 = vmatpush1.msra.mxu0 %v385
    %424 = vmatprep.subr.mxu0 0.0
    %425 = vmatpush1.msra.mxu0 %v386
    %426 = vmatprep.subr.mxu0 0.0
    %427 = vmatpush1.msra.mxu0 0.0
    %428 = vmatprep.subr.mxu0 0.0
    %429 = vmatpush1.msra.mxu0 0.0
    %430 = vmatprep.subr.mxu0 0.0
    %431 = vmatpush1.msra.mxu0 0.0
    %432 = vmatprep.subr.mxu0 0.0
    %433 = vmatpush1.msra.mxu0 0.0
    %434 = vmatprep.subr.mxu0 0.0
    %435 = vmatpush1.msra.mxu0 0.0
    %436 = vmatprep.subr.mxu0 0.0
    %437 = vmatpush1.msra.mxu0 0.0
    %438 = vmatprep.subr.mxu0 0.0
    %439 = vmatpush1.msra.mxu0 0.0
    %440 = vmatprep.subr.mxu0 0.0
    %441 = vmatpush1.msra.mxu0 0.0
    %442 = vmatprep.subr.mxu0 0.0
    %443 = vmatpush1.msra.mxu0 0.0
    %444 = vmatprep.subr.mxu0 0.0
    %445 = vmatpush1.msra.mxu0 0.0
    %446 = vmatprep.subr.mxu0 0.0
    %447 = vmatpush1.msra.mxu0 0.0
    %448 = vmatprep.subr.mxu0 0.0
    %449 = vmatpush1.msra.mxu0 0.0
    %450 = vmatprep.subr.mxu0 0.0
    %451 = vmatpush1.msra.mxu0 0.0
    %452 = vmatprep.subr.mxu0 0.0
    %453 = vmatpush1.msra.mxu0 0.0
    %454 = vmatprep.subr.mxu0 0.0
    %455 = vmatpush1.msra.mxu0 0.0
    %456 = vmatprep.subr.mxu0 0.0
    %457 = vmatpush1.msra.mxu0 0.0
    %458 = vmatprep.mubr.f32.mxu0 0.0
    %459 = vmatmul.mubr.f32.gmra.mrb[0].mxu0 %v370
    %v460 = vpop.f32.mrb[0].mxu0
    %v461 = vadd.f32 %v392, %v460
    %v462 = vpop.f32.mrb[0].mxu0
    %463 = vdwg.mxu0
    %464 = vst [vmem:[%s9] sm:$0xff] %v461
    // Predicated region
    $region58: #{mlp_forward.1} parent=1 // pred_check
      _
    $region59: #{mlp_forward.1} parent=1 // pred_check_branch
      %466 = sbr.rel (0) target = $region61
    $region60: #{mlp_forward.1} parent=1 // pred_region
      _
    $region61: #{mlp_forward.1} parent=1 // pred_fallthru
      _
    // Predicated region
    $region62: #{mlp_forward.1} parent=1 // pred_check
      _
    $region63: #{mlp_forward.1} parent=1 // pred_check_branch
      %468 = sbr.rel (0) target = $region65
    $region64: #{mlp_forward.1} parent=1 // pred_region
      _
    $region65: #{mlp_forward.1} parent=1 // pred_fallthru
      _
    %469 = vsyncpa [#allocation3], 1
    %470 = vsyncpa [#allocation5], 1
    %471 = vsyncpa [#allocation8], 1

</llo_original>
